<compile_context>
chip_gen: v6e
topology: v6e:2x2x1
jax: 0.10.0
libtpu: 0.0.40
codegen_flags: <defaults>
</compile_context>

<pallas_src>
import jax
import jax.numpy as jnp
from jax.experimental import pallas as pl
from jax.experimental.pallas import tpu as pltpu


def _cascaded_tanks_kernel(x_ref, u_ref, wa_ref, w2_ref, b2_ref, dx_ref):
    x = x_ref[...]                       # (Bt, 2)  f32
    u = u_ref[...]                       # (Bt, 1)  f32
    wa = wa_ref[...]                     # (4, 2F): rows = [x0-row | u-row | x1-row | bias-row]

    x0 = x[:, 0:1]                       # (Bt, 1)
    x1 = x[:, 1:2]                       # (Bt, 1)

    # First layer of BOTH sub-nets as VPU broadcast-FMAs on a packed (Bt, 2F)
    # slab.  Lanes [0, F) belong to net_dx1, lanes [F, 2F) to net_dx2; the
    # "u" row is zero in the net_dx2 half and the "x1" row is zero in the
    # net_dx1 half, so no select/mask is needed.
    pre = x0 * wa[0:1, :] + u * wa[1:2, :] + x1 * wa[2:3, :] + wa[3:4, :]
    h = jnp.tanh(pre)                    # one EUP tanh over the packed vreg

    # Second layer of both sub-nets: one block-diagonal (2F, 2) matmul,
    # scale_dx already folded into w2 / b2.
    dx_ref[...] = (
        jnp.dot(h, w2_ref[...], preferred_element_type=jnp.float32) + b2_ref[...]
    )


def pack_params(params, scale_dx=1.0):
    """Pack the two sub-network parameters into lane-dense slabs.

    Returns:
      wa: (4, 2F)  first-layer slab; rows multiply [x0, u, x1, 1].
      w2: (2F, 2)  block-diagonal second-layer weight with scale_dx folded in.
      b2: (1, 2)   second-layer bias with scale_dx folded in.
    """
    F = params["w1a"].shape[1]
    z = jnp.zeros((1, F), jnp.float32)
    wa = jnp.concatenate(
        [
            jnp.concatenate([params["w1a"][0:1], params["w2a"][0:1]], axis=1),  # * x0
            jnp.concatenate([params["w1a"][1:2], z], axis=1),                   # * u
            jnp.concatenate([z, params["w2a"][1:2]], axis=1),                   # * x1
            jnp.concatenate([params["b1a"], params["b2a"]], axis=1),            # + bias
        ],
        axis=0,
    ).astype(jnp.float32)                                                       # (4, 2F)

    w2 = jnp.zeros((2 * F, 2), jnp.float32)
    w2 = w2.at[:F, 0].set(scale_dx * params["w1b"][:, 0])
    w2 = w2.at[F:, 1].set(scale_dx * params["w2b"][:, 0])                       # (2F, 2)
    b2 = (scale_dx * jnp.concatenate([params["b1b"], params["b2b"]], axis=1)
          ).astype(jnp.float32)                                                 # (1, 2)
    return wa, w2, b2


def _pick_batch_tile(B):
    # Largest batch tile that divides B and respects the f32 8-sublane rule.
    for t in (512, 256, 128, 64, 32, 16, 8):
        if B % t == 0:
            return t
    return B  # full-array-dim escape hatch for odd batch sizes


def cascaded_tanks_forward(in_x, in_u, packed):
    """packed = pack_params(params, scale_dx)."""
    wa, w2, b2 = packed
    B = in_x.shape[0]
    F2 = wa.shape[1]                      # 2 * n_feat
    bt = _pick_batch_tile(B)
    grid = (B // bt,)

    return pl.pallas_call(
        _cascaded_tanks_kernel,
        out_shape=jax.ShapeDtypeStruct((B, 2), jnp.float32),
        grid=grid,
        in_specs=[
            pl.BlockSpec((bt, 2), lambda i: (i, 0)),     # in_x
            pl.BlockSpec((bt, 1), lambda i: (i, 0)),     # in_u
            pl.BlockSpec((4, F2), lambda i: (0, 0)),     # first-layer slab (resident)
            pl.BlockSpec((F2, 2), lambda i: (0, 0)),     # block-diag second layer (resident)
            pl.BlockSpec((1, 2), lambda i: (0, 0)),      # second-layer bias (resident)
        ],
        out_specs=pl.BlockSpec((bt, 2), lambda i: (i, 0)),
        compiler_params=pltpu.CompilerParams(
            dimension_semantics=("parallel",),           # shards batch tiles over TCs (v7x)
        ),
    )(in_x, in_u, wa, w2, b2)


def init_params(key, n_feat=64, init_std=1e-4):
    """Mirrors the PyTorch init_small=True initialization:
    Linear weights ~ N(0, init_std), biases = 0.  Weights stored as
    (in_features, out_features)."""
    k1, k2, k3, k4 = jax.random.split(key, 4)
    return {
        "w1a": init_std * jax.random.normal(k1, (2, n_feat), dtype=jnp.float32),
        "b1a": jnp.zeros((1, n_feat), dtype=jnp.float32),
        "w1b": init_std * jax.random.normal(k2, (n_feat, 1), dtype=jnp.float32),
        "b1b": jnp.zeros((1, 1), dtype=jnp.float32),
        "w2a": init_std * jax.random.normal(k3, (2, n_feat), dtype=jnp.float32),
        "b2a": jnp.zeros((1, n_feat), dtype=jnp.float32),
        "w2b": init_std * jax.random.normal(k4, (n_feat, 1), dtype=jnp.float32),
        "b2b": jnp.zeros((1, 1), dtype=jnp.float32),
    }


def reference_forward(in_x, in_u, params, scale_dx=1.0):
    """Pure-JAX reference matching the PyTorch module semantics."""
    in_1 = jnp.concatenate([in_x[..., 0:1], in_u], axis=-1)
    h1 = jnp.tanh(in_1 @ params["w1a"] + params["b1a"])
    dx_1 = h1 @ params["w1b"] + params["b1b"]
    h2 = jnp.tanh(in_x @ params["w2a"] + params["b2a"])
    dx_2 = h2 @ params["w2b"] + params["b2b"]
    return jnp.concatenate([dx_1, dx_2], axis=-1) * scale_dx


if __name__ == "__main__":
    key = jax.random.PRNGKey(0)
    kp, kx, ku = jax.random.split(key, 3)

    n_feat = 64
    batch = 8
    scale_dx = 2.0

    # Larger init_std than the torch default (1e-4) so the numerical check is
    # meaningful (outputs O(1) instead of O(1e-8)); semantics are identical.
    params = init_params(kp, n_feat=n_feat, init_std=0.5)
    packed = pack_params(params, scale_dx=scale_dx)

    in_x = jax.random.normal(kx, (batch, 2), dtype=jnp.float32)
    in_u = jax.random.normal(ku, (batch, 1), dtype=jnp.float32)

    dx = cascaded_tanks_forward(in_x, in_u, packed)
    dx = jax.block_until_ready(dx)

    dx_ref = reference_forward(in_x, in_u, params, scale_dx=scale_dx)
    assert dx.shape == (batch, 2)
    assert jnp.allclose(dx, dx_ref, atol=2e-5, rtol=1e-4), "mismatch vs reference"

    print("KERNEL_OK")
</pallas_src>

<mosaic_0001>
module attributes {stable_mosaic.version = 11 : i64} {
  func.func @_cascaded_tanks_kernel(%arg0: i32, %arg1: memref<8x2xf32, #tpu.memory_space<vmem>>, %arg2: memref<8x1xf32, #tpu.memory_space<vmem>>, %arg3: memref<4x128xf32, #tpu.memory_space<vmem>>, %arg4: memref<128x2xf32, #tpu.memory_space<vmem>>, %arg5: memref<1x2xf32, #tpu.memory_space<vmem>>, %arg6: memref<8x2xf32, #tpu.memory_space<vmem>>) attributes {dimension_semantics = [#tpu.dimension_semantics<parallel>], iteration_bounds = array<i64: 1>, scalar_prefetch = 0 : i64, scratch_operands = 0 : i64, tpu.core_type = #tpu.core_type<tc>, window_params = [{transform_indices = @transform_0, window_bounds = array<i64: 8, 2>}, {transform_indices = @transform_1, window_bounds = array<i64: 8, 1>}, {pipeline_mode = #tpu.pipeline_mode<synchronous>, transform_indices = @transform_2, window_bounds = array<i64: 4, 128>}, {pipeline_mode = #tpu.pipeline_mode<synchronous>, transform_indices = @transform_3, window_bounds = array<i64: 128, 2>}, {pipeline_mode = #tpu.pipeline_mode<synchronous>, transform_indices = @transform_4, window_bounds = array<i64: 1, 2>}, {transform_indices = @transform_5, window_bounds = array<i64: 8, 2>}]} {
    %c0 = arith.constant 0 : index
    %c0_0 = arith.constant 0 : index
    %0 = vector.load %arg1[%c0, %c0_0] : memref<8x2xf32, #tpu.memory_space<vmem>>, vector<8x2xf32>
    %c0_1 = arith.constant 0 : index
    %c0_2 = arith.constant 0 : index
    %1 = vector.load %arg2[%c0_1, %c0_2] : memref<8x1xf32, #tpu.memory_space<vmem>>, vector<8x1xf32>
    %c0_3 = arith.constant 0 : index
    %c0_4 = arith.constant 0 : index
    %2 = vector.load %arg3[%c0_3, %c0_4] : memref<4x128xf32, #tpu.memory_space<vmem>>, vector<4x128xf32>
    %3 = vector.extract_strided_slice %0 {offsets = [0, 0], sizes = [8, 1], strides = [1, 1]} : vector<8x2xf32> to vector<8x1xf32>
    %4 = vector.extract_strided_slice %0 {offsets = [0, 1], sizes = [8, 1], strides = [1, 1]} : vector<8x2xf32> to vector<8x1xf32>
    %5 = vector.extract_strided_slice %2 {offsets = [0, 0], sizes = [1, 128], strides = [1, 1]} : vector<4x128xf32> to vector<1x128xf32>
    %6 = vector.broadcast %3 : vector<8x1xf32> to vector<8x128xf32>
    %7 = vector.broadcast %5 : vector<1x128xf32> to vector<8x128xf32>
    %8 = arith.mulf %6, %7 : vector<8x128xf32>
    %9 = vector.extract_strided_slice %2 {offsets = [1, 0], sizes = [1, 128], strides = [1, 1]} : vector<4x128xf32> to vector<1x128xf32>
    %10 = vector.broadcast %1 : vector<8x1xf32> to vector<8x128xf32>
    %11 = vector.broadcast %9 : vector<1x128xf32> to vector<8x128xf32>
    %12 = arith.mulf %10, %11 : vector<8x128xf32>
    %13 = arith.addf %8, %12 : vector<8x128xf32>
    %14 = vector.extract_strided_slice %2 {offsets = [2, 0], sizes = [1, 128], strides = [1, 1]} : vector<4x128xf32> to vector<1x128xf32>
    %15 = vector.broadcast %4 : vector<8x1xf32> to vector<8x128xf32>
    %16 = vector.broadcast %14 : vector<1x128xf32> to vector<8x128xf32>
    %17 = arith.mulf %15, %16 : vector<8x128xf32>
    %18 = arith.addf %13, %17 : vector<8x128xf32>
    %19 = vector.extract_strided_slice %2 {offsets = [3, 0], sizes = [1, 128], strides = [1, 1]} : vector<4x128xf32> to vector<1x128xf32>
    %20 = vector.broadcast %19 : vector<1x128xf32> to vector<8x128xf32>
    %21 = arith.addf %18, %20 : vector<8x128xf32>
    %22 = math.tanh %21 : vector<8x128xf32>
    %c0_5 = arith.constant 0 : index
    %c0_6 = arith.constant 0 : index
    %23 = vector.load %arg4[%c0_5, %c0_6] : memref<128x2xf32, #tpu.memory_space<vmem>>, vector<128x2xf32>
    %cst = arith.constant dense<0.000000e+00> : vector<8x2xf32>
    %24 = tpu.matmul %22, %23, %cst {dimension_numbers = #tpu.dot_dimension_numbers<[1], [0], [0], [1], [0, 0, 1, 1], [], []>} : vector<8x128xf32>, vector<128x2xf32>, vector<8x2xf32> -> vector<8x2xf32>
    %c0_7 = arith.constant 0 : index
    %c0_8 = arith.constant 0 : index
    %25 = vector.load %arg5[%c0_7, %c0_8] : memref<1x2xf32, #tpu.memory_space<vmem>>, vector<1x2xf32>
    %26 = vector.broadcast %25 : vector<1x2xf32> to vector<8x2xf32>
    %27 = arith.addf %24, %26 : vector<8x2xf32>
    %c0_9 = arith.constant 0 : index
    %c0_10 = arith.constant 0 : index
    %28 = vector.load %arg6[%c0_9, %c0_10] : memref<8x2xf32, #tpu.memory_space<vmem>>, vector<8x2xf32>
    tpu.vector_store %arg6[%c0_9, %c0_10], %27 {strides = array<i32>} : memref<8x2xf32, #tpu.memory_space<vmem>>, vector<8x2xf32>,
    return
  }
  func.func @transform_0(%arg0: i32) -> (i32, i32) {
    %c0_i32 = arith.constant 0 : i32
    %c0_i32_0 = arith.constant 0 : i32
    return %arg0, %c0_i32 : i32, i32
  }
  func.func @transform_1(%arg0: i32) -> (i32, i32) {
    %c0_i32 = arith.constant 0 : i32
    %c0_i32_0 = arith.constant 0 : i32
    return %arg0, %c0_i32 : i32, i32
  }
  func.func @transform_2(%arg0: i32) -> (i32, i32) {
    %c0_i32 = arith.constant 0 : i32
    %c0_i32_0 = arith.constant 0 : i32
    %c0_i32_1 = arith.constant 0 : i32
    return %c0_i32, %c0_i32_0 : i32, i32
  }
  func.func @transform_3(%arg0: i32) -> (i32, i32) {
    %c0_i32 = arith.constant 0 : i32
    %c0_i32_0 = arith.constant 0 : i32
    %c0_i32_1 = arith.constant 0 : i32
    return %c0_i32, %c0_i32_0 : i32, i32
  }
  func.func @transform_4(%arg0: i32) -> (i32, i32) {
    %c0_i32 = arith.constant 0 : i32
    %c0_i32_0 = arith.constant 0 : i32
    %c0_i32_1 = arith.constant 0 : i32
    return %c0_i32, %c0_i32_0 : i32, i32
  }
  func.func @transform_5(%arg0: i32) -> (i32, i32) {
    %c0_i32 = arith.constant 0 : i32
    %c0_i32_0 = arith.constant 0 : i32
    return %arg0, %c0_i32 : i32, i32
  }
}

</mosaic_0001>

<llo_original>
// kernel: tpu_custom_call.1
$region0: #{tpu_custom_call.1}
  #allocation0 [shape = 'u32[]', space=smem, size = 0x4, offset = 0x4, fixed_abs, tag = 'smem constant byte address 0x4 - core index']
  #allocation1 [shape = 'u32[144,128]{1,0:T(1,128)}', space=vmem, size = 0x12000, scoped, tag = 'internal scratch']
  %s0 = inlined_call_operand.vmem [shape: f32[8,2], index: 0, kind: input, shape index: {}]
  %s1 = inlined_call_operand.vmem [shape: f32[8,1], index: 1, kind: input, shape index: {}]
  %s2 = inlined_call_operand.vmem [shape: f32[4,128], index: 2, kind: input, shape index: {}]
  %s3 = inlined_call_operand.vmem [shape: f32[128,2], index: 3, kind: input, shape index: {}]
  %s4 = inlined_call_operand.vmem [shape: f32[1,2], index: 4, kind: input, shape index: {}]
  %s5 = inlined_call_operand.vmem [shape: f32[8,2], index: 5, kind: output, shape index: {}]
  %s6 = sld [smem:[#allocation0]]
  $region30: #{tpu_custom_call.1} parent=0
    _
  %s8 = ssub.s32 1, %s6
  %s9 = scalar_select 0, %s8, %s6
  // Predicated region
  $region2: #{tpu_custom_call.1} parent=0 // pred_check
    _
  $region3: #{tpu_custom_call.1} parent=0 // pred_check_branch
    %11 = sbr.rel (0) target = $region5
  $region4: #{tpu_custom_call.1} parent=0 // pred_region
    _
  $region5: #{tpu_custom_call.1} parent=0 // pred_fallthru
    _
  // Predicated region
  $region6: #{tpu_custom_call.1} parent=0 // pred_check
    _
  $region7: #{tpu_custom_call.1} parent=0 // pred_check_branch
    %13 = sbr.rel (0) target = $region9
  $region8: #{tpu_custom_call.1} parent=0 // pred_region
    _
  $region9: #{tpu_custom_call.1} parent=0 // pred_fallthru
    _
  // Predicated region
  $region10: #{tpu_custom_call.1} parent=0 // pred_check
    _
  $region11: #{tpu_custom_call.1} parent=0 // pred_check_branch
    %15 = sbr.rel (0) target = $region13
  $region12: #{tpu_custom_call.1} parent=0 // pred_region
    _
  $region13: #{tpu_custom_call.1} parent=0 // pred_fallthru
    _
  // Predicated region
  $region14: #{tpu_custom_call.1} parent=0 // pred_check
    _
  $region15: #{tpu_custom_call.1} parent=0 // pred_check_branch
    %17 = sbr.rel (0) target = $region17
  $region16: #{tpu_custom_call.1} parent=0 // pred_region
    _
  $region17: #{tpu_custom_call.1} parent=0 // pred_fallthru
    _
  // Predicated region
  $region18: #{tpu_custom_call.1} parent=0 // pred_check
    _
  $region19: #{tpu_custom_call.1} parent=0 // pred_check_branch
    %19 = sbr.rel (0) target = $region21
  $region20: #{tpu_custom_call.1} parent=0 // pred_region
    _
  $region21: #{tpu_custom_call.1} parent=0 // pred_fallthru
    _
  %v20 = vld [vmem:[%s0] sm:$0xff]
  %v21 = vld [vmem:[%s1] sm:$0xff]
  %v22 = vld [vmem:[%s2] sm:$0xf]
  %24 = vset.pattern.permute.xlu0 0
  %25 = vperm.xlu0 %24, %v20
  %v26 = vpop.permute.xlu0 %25
  %v28 = vlaneseq
  %v29 = vshrl.u32 %v28, 7
  %v30 = vsub.s32 0, %v29
  %v31 = vrot.slane %v22, %v30
  %v32 = vmul.f32 %v26, %v31
  %34 = vset.pattern.permute.xlu0 0
  %35 = vperm.xlu0 %34, %v21
  %v36 = vpop.permute.xlu0 %35
  %v38 = vlaneseq
  %v39 = vshrl.u32 %v38, 7
  %v40 = vsub.s32 1, %v39
  %v41 = vrot.slane %v22, %v40
  %v42 = vmul.f32 %v36, %v41
  %v43 = vadd.f32 %v32, %v42
  %44 = vset.pattern.permute.xlu0 1
  %45 = vperm.xlu0 %44, %v20
  %v46 = vpop.permute.xlu0 %45
  %v48 = vlaneseq
  %v49 = vshrl.u32 %v48, 7
  %v50 = vsub.s32 2, %v49
  %v51 = vrot.slane %v22, %v50
  %v52 = vmul.f32 %v46, %v51
  %v53 = vadd.f32 %v43, %v52
  %v54 = vlaneseq
  %v55 = vshrl.u32 %v54, 7
  %v56 = vsub.s32 3, %v55
  %v57 = vrot.slane %v22, %v56
  %v58 = vadd.f32 %v53, %v57
  %v59 = vtanh.pop %v58
  %v60 = vld [vmem:[%s3] sm:$0xff]
  %v61 = vld [vmem:[%s3 + $0x8] sm:$0xff]
  %v62 = vld [vmem:[%s3 + $0x10] sm:$0xff]
  %v63 = vld [vmem:[%s3 + $0x18] sm:$0xff]
  %v64 = vld [vmem:[%s3 + $0x20] sm:$0xff]
  %v65 = vld [vmem:[%s3 + $0x28] sm:$0xff]
  %v66 = vld [vmem:[%s3 + $0x30] sm:$0xff]
  %v67 = vld [vmem:[%s3 + $0x38] sm:$0xff]
  %v68 = vld [vmem:[%s3 + $0x40] sm:$0xff]
  %v69 = vld [vmem:[%s3 + $0x48] sm:$0xff]
  %v70 = vld [vmem:[%s3 + $0x50] sm:$0xff]
  %v71 = vld [vmem:[%s3 + $0x58] sm:$0xff]
  %v72 = vld [vmem:[%s3 + $0x60] sm:$0xff]
  %v73 = vld [vmem:[%s3 + $0x68] sm:$0xff]
  %v74 = vld [vmem:[%s3 + $0x70] sm:$0xff]
  %v75 = vld [vmem:[%s3 + $0x78] sm:$0xff]
  %v76 = vld [vmem:[%s4] sm:$0x1]
  %v78 = vlaneseq
  %v79 = vshrl.u32 %v78, 7
  %v80 = vsub.s32 0, %v79
  %v81 = vrot.slane %v76, %v80
  %83 = vmatprep.subr.mxu0 0.0
  %84 = vmatpush1.msra.mxu0 %v75
  %85 = vmatprep.subr.mxu0 0.0
  %86 = vmatpush1.msra.mxu0 %v74
  %87 = vmatprep.subr.mxu0 0.0
  %88 = vmatpush1.msra.mxu0 %v73
  %89 = vmatprep.subr.mxu0 0.0
  %90 = vmatpush1.msra.mxu0 %v72
  %91 = vmatprep.subr.mxu0 0.0
  %92 = vmatpush1.msra.mxu0 %v71
  %93 = vmatprep.subr.mxu0 0.0
  %94 = vmatpush1.msra.mxu0 %v70
  %95 = vmatprep.subr.mxu0 0.0
  %96 = vmatpush1.msra.mxu0 %v69
  %97 = vmatprep.subr.mxu0 0.0
  %98 = vmatpush1.msra.mxu0 %v68
  %99 = vmatprep.subr.mxu0 0.0
  %100 = vmatpush1.msra.mxu0 %v67
  %101 = vmatprep.subr.mxu0 0.0
  %102 = vmatpush1.msra.mxu0 %v66
  %103 = vmatprep.subr.mxu0 0.0
  %104 = vmatpush1.msra.mxu0 %v65
  %105 = vmatprep.subr.mxu0 0.0
  %106 = vmatpush1.msra.mxu0 %v64
  %107 = vmatprep.subr.mxu0 0.0
  %108 = vmatpush1.msra.mxu0 %v63
  %109 = vmatprep.subr.mxu0 0.0
  %110 = vmatpush1.msra.mxu0 %v62
  %111 = vmatprep.subr.mxu0 0.0
  %112 = vmatpush1.msra.mxu0 %v61
  %113 = vmatprep.subr.mxu0 0.0
  %114 = vmatpush1.msra.mxu0 %v60
  %115 = vmatprep.subr.mxu0 0.0
  %116 = vmatpush2.msra.mxu0 0.0
  %117 = vmatprep.subr.mxu0 0.0
  %118 = vmatpush2.msra.mxu0 0.0
  %119 = vmatprep.subr.mxu0 0.0
  %120 = vmatpush2.msra.mxu0 0.0
  %121 = vmatprep.subr.mxu0 0.0
  %122 = vmatpush2.msra.mxu0 0.0
  %123 = vmatprep.subr.mxu0 0.0
  %124 = vmatpush2.msra.mxu0 0.0
  %125 = vmatprep.subr.mxu0 0.0
  %126 = vmatpush2.msra.mxu0 0.0
  %127 = vmatprep.subr.mxu0 0.0
  %128 = vmatpush2.msra.mxu0 0.0
  %129 = vmatprep.subr.mxu0 0.0
  %130 = vmatpush2.msra.mxu0 0.0
  %131 = vmatprep.subr.mxu0 0.0
  %132 = vmatpush2.msra.mxu0 0.0
  %133 = vmatprep.subr.mxu0 0.0
  %134 = vmatpush2.msra.mxu0 0.0
  %135 = vmatprep.subr.mxu0 0.0
  %136 = vmatpush2.msra.mxu0 0.0
  %137 = vmatprep.subr.mxu0 0.0
  %138 = vmatpush2.msra.mxu0 0.0
  %139 = vmatprep.subr.mxu0 0.0
  %140 = vmatpush2.msra.mxu0 0.0
  %141 = vmatprep.subr.mxu0 0.0
  %142 = vmatpush2.msra.mxu0 0.0
  %143 = vmatprep.subr.mxu0 0.0
  %144 = vmatpush2.msra.mxu0 0.0
  %145 = vmatprep.subr.mxu0 0.0
  %146 = vmatpush2.msra.mxu0 0.0
  %147 = vmatprep.mubr.f32.mxu0 0.0
  %148 = vmatmul.mubr.f32.gmra.mxu0 %v59
  %v149 = vpop.f32.mrf.mxu0
  %v150 = vadd.f32 %v81, %v149
  %v151 = vpop.f32.mrf.mxu0
  %152 = vdwg.mxu0
  %vm153 = vcmask 15360
  %154 = vst.msk [vmem:[%s5] sm:$0xff] %vm153, %v150
  // Predicated region
  $region22: #{tpu_custom_call.1} parent=0 // pred_check
    _
  $region23: #{tpu_custom_call.1} parent=0 // pred_check_branch
    %156 = sbr.rel (0) target = $region25
  $region24: #{tpu_custom_call.1} parent=0 // pred_region
    _
  $region25: #{tpu_custom_call.1} parent=0 // pred_fallthru
    _
  // Predicated region
  $region26: #{tpu_custom_call.1} parent=0 // pred_check
    _
  $region27: #{tpu_custom_call.1} parent=0 // pred_check_branch
    %158 = sbr.rel (0) target = $region29
  $region28: #{tpu_custom_call.1} parent=0 // pred_region
    _
  $region29: #{tpu_custom_call.1} parent=0 // pred_fallthru
    _

</llo_original>
